<compile_context>
chip_gen: v5e
topology: v5e:2x2
jax: 0.10.0
libtpu: 0.0.40
codegen_flags: <defaults>
</compile_context>

<pallas_src>
import jax
import jax.numpy as jnp
from jax.experimental import pallas as pl
from jax.experimental.pallas import tpu as pltpu


def _round_up(x, m):
    return ((x + m - 1) // m) * m


def _multitask_kernel(u_ref, q_ref, w1u_ref, w1q_ref, w1x_ref,
                      b1_ref, w2_ref, b2_ref, out_ref):
    u = u_ref[...]                                   # (TB, D) stream dtype
    q = q_ref[...]                                   # (TB, D) stream dtype

    # Upcast for the elementwise product / dot-product reduction: keeps the
    # factorization head accurate and avoids the bf16 VPU path on v5e.
    uf = u.astype(jnp.float32)
    qf = q.astype(jnp.float32)
    uq_f = uf * qf                                   # (TB, D) f32, VPU
    pred = jnp.sum(uq_f, axis=-1, keepdims=True)     # (TB, 1)  lane reduce

    # First linear (3D -> H) without a concat: split-W1 MXU accumulate (f32 acc).
    uq = uq_f.astype(u.dtype)
    h = (jnp.dot(u, w1u_ref[...], preferred_element_type=jnp.float32)
         + jnp.dot(q, w1q_ref[...], preferred_element_type=jnp.float32)
         + jnp.dot(uq, w1x_ref[...], preferred_element_type=jnp.float32)
         + b1_ref[...])
    h = jnp.maximum(h, 0.0)                          # ReLU (VPU)

    # Second linear (H -> 1) as VPU multiply + lane reduce; w2_ref is (1, H) f32.
    score = jnp.sum(h * w2_ref[...], axis=-1, keepdims=True) + b2_ref[...]

    # Packed output: col 0 = predictions (before the A+B bias), col 1 = score.
    out_ref[:, 0:1] = pred
    out_ref[:, 1:2] = score
    # TODO(synk): lane-dense (2, TB) output (unmasked vst) needs an in-kernel
    # sublane->lane relayout of the (TB, 1) results; output bytes are ~3% of
    # the streamed bytes here, so it is left as a follow-up.


def multitask_forward(user_ids, item_ids, params, *, tile_b=2048,
                      stream_dtype=jnp.bfloat16):
    """Returns (predictions, score), each of shape (batch,), like the torch module."""
    D = params["U"].shape[1]
    H = params["W1"].shape[1]
    batch = user_ids.shape[0]

    # Per-pair bias (A + B): tiny (batch,) vector added after the kernel, so the
    # kernel does not need a lane-width-2 streamed input.
    ab = (jnp.take(params["A"], user_ids, axis=0)
          + jnp.take(params["B"], item_ids, axis=0))[:, 0].astype(jnp.float32)

    # Tile selection: big tiles amortize the ~0.35us/step grid overhead, but keep
    # >= 2 grid steps when possible so both TensorCores on v7x engage.
    b8 = _round_up(batch, 8)
    tb = min(tile_b, b8)
    if b8 > 8:
        tb = min(tb, _round_up((b8 + 1) // 2, 8))
    tb = max(tb, 8)
    b_pad = _round_up(b8, tb)

    # Pad the cheap int32 id vectors (id 0 is always valid); the gather then
    # produces the padded size directly -- no jnp.pad on (B, D) f32 arrays.
    if b_pad != batch:
        pad = b_pad - batch
        user_ids = jnp.pad(user_ids, (0, pad))
        item_ids = jnp.pad(item_ids, (0, pad))

    # Embedding gathers (XLA glue); gathered intermediates are written/streamed
    # in the (bf16 by default) stream dtype.
    U_emb = jnp.take(params["U"], user_ids, axis=0).astype(stream_dtype)   # (Bp, D)
    Q_emb = jnp.take(params["Q"], item_ids, axis=0).astype(stream_dtype)   # (Bp, D)

    # Pre-split W1 into three (D, H) slabs.  NOTE: W1 is stored (in, out) here;
    # real torch nn.Linear weights are (out, in) and would need a transpose.
    W1 = params["W1"].astype(stream_dtype)
    W1u, W1q, W1x = W1[:D], W1[D:2 * D], W1[2 * D:3 * D]
    b1 = params["b1"].reshape(1, H).astype(jnp.float32)
    W2r = params["W2"].reshape(1, H).astype(jnp.float32)   # (H,1) -> (1,H)
    b2 = params["b2"].reshape(1, 1).astype(jnp.float32)

    grid = (b_pad // tb,)

    def row_spec(shape):
        return pl.BlockSpec(shape, lambda i: (i, 0))

    def const_spec(shape):
        return pl.BlockSpec(shape, lambda i: (0, 0))

    sb = jnp.dtype(stream_dtype).itemsize
    flops = 2 * b_pad * (3 * D * H) + 2 * b_pad * H + 4 * b_pad * D
    bytes_accessed = (b_pad * (2 * D * sb + 2 * 4)
                      + (3 * D * H) * sb + (2 * H + 1) * 4)

    out = pl.pallas_call(
        _multitask_kernel,
        out_shape=jax.ShapeDtypeStruct((b_pad, 2), jnp.float32),
        grid_spec=pltpu.PrefetchScalarGridSpec(
            num_scalar_prefetch=0,
            grid=grid,
            in_specs=[
                row_spec((tb, D)),       # U_emb (streamed)
                row_spec((tb, D)),       # Q_emb (streamed)
                const_spec((D, H)),      # W1 slab for U    (resident)
                const_spec((D, H)),      # W1 slab for Q    (resident)
                const_spec((D, H)),      # W1 slab for U*Q  (resident)
                const_spec((1, H)),      # b1
                const_spec((1, H)),      # W2 as a row
                const_spec((1, 1)),      # b2
            ],
            out_specs=row_spec((tb, 2)),
        ),
        compiler_params=pltpu.CompilerParams(
            dimension_semantics=("parallel",),
        ),
        cost_estimate=pl.CostEstimate(
            flops=flops, transcendentals=0, bytes_accessed=bytes_accessed),
    )(U_emb, Q_emb, W1u, W1q, W1x, b1, W2r, b2)

    predictions = out[:batch, 0] + ab
    score = out[:batch, 1]
    return predictions, score


def init_params(key, num_users, num_items, embedding_dim=32, layer_sizes=(96, 64)):
    """Deterministic parameter init mirroring the torch module's __init__."""
    k_u, k_q, k_w1, k_bb1, k_w2, k_bb2 = jax.random.split(key, 6)
    d = embedding_dim
    # ScaledEmbedding: normal(0, 1/embedding_dim)
    U = (1.0 / d) * jax.random.normal(k_u, (num_users, d), jnp.float32)
    Q = (1.0 / d) * jax.random.normal(k_q, (num_items, d), jnp.float32)
    # ZeroEmbedding: zeros
    A = jnp.zeros((num_users, 1), jnp.float32)
    B = jnp.zeros((num_items, 1), jnp.float32)
    # nn.Linear default init: U(-1/sqrt(fan_in), 1/sqrt(fan_in)) for weight and bias.
    in1, h1 = layer_sizes[0], layer_sizes[1]
    lim1 = 1.0 / jnp.sqrt(in1)
    W1 = jax.random.uniform(k_w1, (in1, h1), jnp.float32, -lim1, lim1)   # stored (in, out)
    b1 = jax.random.uniform(k_bb1, (1, h1), jnp.float32, -lim1, lim1)
    lim2 = 1.0 / jnp.sqrt(h1)
    W2 = jax.random.uniform(k_w2, (h1, 1), jnp.float32, -lim2, lim2)
    b2 = jax.random.uniform(k_bb2, (1, 1), jnp.float32, -lim2, lim2)
    return {"U": U, "Q": Q, "A": A, "B": B, "W1": W1, "b1": b1, "W2": W2, "b2": b2}


def reference_forward(user_ids, item_ids, params):
    """Pure-JAX f32 reference matching the torch forward semantics."""
    U_emb = params["U"][user_ids]
    Q_emb = params["Q"][item_ids]
    A_emb = params["A"][user_ids]
    B_emb = params["B"][item_ids]
    UQ_dot = jnp.einsum("bd,bd->b", U_emb, Q_emb)[:, None]
    predictions = (UQ_dot + A_emb + B_emb)[:, 0]
    mlp_in = jnp.concatenate([U_emb, Q_emb, U_emb * Q_emb], axis=1)
    h = jnp.maximum(mlp_in @ params["W1"] + params["b1"], 0.0)
    score = (h @ params["W2"] + params["b2"])[:, 0]
    return predictions, score


if __name__ == "__main__":
    key = jax.random.PRNGKey(0)
    k_params, k_uid, k_iid = jax.random.split(key, 3)

    num_users, num_items = 16, 24
    embedding_dim = 32
    layer_sizes = (96, 64)   # 96 == 3 * embedding_dim (concat of U, Q, U*Q)

    params = init_params(k_params, num_users, num_items, embedding_dim, layer_sizes)
    fwd = jax.jit(multitask_forward, static_argnames=("tile_b", "stream_dtype"))

    # Case 1: f32 streaming, batch exactly one sublane tile -> tight check.
    batch = 8
    user_ids = jax.random.randint(k_uid, (batch,), 0, num_users)
    item_ids = jax.random.randint(k_iid, (batch,), 0, num_items)
    pred, score = jax.block_until_ready(
        fwd(user_ids, item_ids, params, stream_dtype=jnp.float32))
    pred_ref, score_ref = reference_forward(user_ids, item_ids, params)
    assert pred.shape == (batch,) and score.shape == (batch,)
    assert jnp.allclose(pred, pred_ref, atol=1e-5, rtol=1e-5)
    assert jnp.allclose(score, score_ref, atol=1e-5, rtol=1e-5)

    # Case 2: ragged batch (exercises id padding / output slicing), f32.
    batch2 = 5
    user_ids2 = jax.random.randint(jax.random.PRNGKey(1), (batch2,), 0, num_users)
    item_ids2 = jax.random.randint(jax.random.PRNGKey(2), (batch2,), 0, num_items)
    pred2, score2 = jax.block_until_ready(
        fwd(user_ids2, item_ids2, params, stream_dtype=jnp.float32))
    pred2_ref, score2_ref = reference_forward(user_ids2, item_ids2, params)
    assert pred2.shape == (batch2,) and score2.shape == (batch2,)
    assert jnp.allclose(pred2, pred2_ref, atol=1e-5, rtol=1e-5)
    assert jnp.allclose(score2, score2_ref, atol=1e-5, rtol=1e-5)

    # Case 3: default bf16 streaming with a multi-step grid (2 tiles of 24 rows);
    # bf16 rounding of the streamed embeddings -> relaxed tolerances.
    batch3 = 48
    user_ids3 = jax.random.randint(jax.random.PRNGKey(3), (batch3,), 0, num_users)
    item_ids3 = jax.random.randint(jax.random.PRNGKey(4), (batch3,), 0, num_items)
    pred3, score3 = jax.block_until_ready(fwd(user_ids3, item_ids3, params))
    pred3_ref, score3_ref = reference_forward(user_ids3, item_ids3, params)
    assert pred3.shape == (batch3,) and score3.shape == (batch3,)
    assert jnp.allclose(pred3, pred3_ref, atol=2e-3, rtol=2e-2)
    assert jnp.allclose(score3, score3_ref, atol=2e-3, rtol=2e-2)

    print("KERNEL_OK")
</pallas_src>

<mosaic_0001>
module attributes {stable_mosaic.version = 11 : i64} {
  func.func @_multitask_kernel(%arg0: i32, %arg1: memref<8x32xf32, #tpu.memory_space<vmem>>, %arg2: memref<8x32xf32, #tpu.memory_space<vmem>>, %arg3: memref<32x64xf32, #tpu.memory_space<vmem>>, %arg4: memref<32x64xf32, #tpu.memory_space<vmem>>, %arg5: memref<32x64xf32, #tpu.memory_space<vmem>>, %arg6: memref<1x64xf32, #tpu.memory_space<vmem>>, %arg7: memref<1x64xf32, #tpu.memory_space<vmem>>, %arg8: memref<1x1xf32, #tpu.memory_space<vmem>>, %arg9: memref<8x2xf32, #tpu.memory_space<vmem>>) attributes {dimension_semantics = [#tpu.dimension_semantics<parallel>], iteration_bounds = array<i64: 1>, scalar_prefetch = 0 : i64, scratch_operands = 0 : i64, tpu.core_type = #tpu.core_type<tc>, window_params = [{transform_indices = @transform_0, window_bounds = array<i64: 8, 32>}, {transform_indices = @transform_1, window_bounds = array<i64: 8, 32>}, {pipeline_mode = #tpu.pipeline_mode<synchronous>, transform_indices = @transform_2, window_bounds = array<i64: 32, 64>}, {pipeline_mode = #tpu.pipeline_mode<synchronous>, transform_indices = @transform_3, window_bounds = array<i64: 32, 64>}, {pipeline_mode = #tpu.pipeline_mode<synchronous>, transform_indices = @transform_4, window_bounds = array<i64: 32, 64>}, {pipeline_mode = #tpu.pipeline_mode<synchronous>, transform_indices = @transform_5, window_bounds = array<i64: 1, 64>}, {pipeline_mode = #tpu.pipeline_mode<synchronous>, transform_indices = @transform_6, window_bounds = array<i64: 1, 64>}, {pipeline_mode = #tpu.pipeline_mode<synchronous>, transform_indices = @transform_7, window_bounds = array<i64: 1, 1>}, {transform_indices = @transform_8, window_bounds = array<i64: 8, 2>}]} {
    %c0 = arith.constant 0 : index
    %c0_0 = arith.constant 0 : index
    %0 = vector.load %arg1[%c0, %c0_0] : memref<8x32xf32, #tpu.memory_space<vmem>>, vector<8x32xf32>
    %c0_1 = arith.constant 0 : index
    %c0_2 = arith.constant 0 : index
    %1 = vector.load %arg2[%c0_1, %c0_2] : memref<8x32xf32, #tpu.memory_space<vmem>>, vector<8x32xf32>
    %2 = arith.mulf %0, %1 : vector<8x32xf32>
    %cst = arith.constant dense<0.000000e+00> : vector<8xf32>
    %3 = vector.multi_reduction <add>, %2, %cst [1] : vector<8x32xf32> to vector<8xf32>
    %4 = vector.shape_cast %3 : vector<8xf32> to vector<8x1xf32>
    %c0_3 = arith.constant 0 : index
    %c0_4 = arith.constant 0 : index
    %5 = vector.load %arg3[%c0_3, %c0_4] : memref<32x64xf32, #tpu.memory_space<vmem>>, vector<32x64xf32>
    %cst_5 = arith.constant dense<0.000000e+00> : vector<8x64xf32>
    %6 = tpu.matmul %0, %5, %cst_5 {dimension_numbers = #tpu.dot_dimension_numbers<[1], [0], [0], [1], [0, 0, 1, 1], [], []>} : vector<8x32xf32>, vector<32x64xf32>, vector<8x64xf32> -> vector<8x64xf32>
    %c0_6 = arith.constant 0 : index
    %c0_7 = arith.constant 0 : index
    %7 = vector.load %arg4[%c0_6, %c0_7] : memref<32x64xf32, #tpu.memory_space<vmem>>, vector<32x64xf32>
    %cst_8 = arith.constant dense<0.000000e+00> : vector<8x64xf32>
    %8 = tpu.matmul %1, %7, %cst_8 {dimension_numbers = #tpu.dot_dimension_numbers<[1], [0], [0], [1], [0, 0, 1, 1], [], []>} : vector<8x32xf32>, vector<32x64xf32>, vector<8x64xf32> -> vector<8x64xf32>
    %9 = arith.addf %6, %8 : vector<8x64xf32>
    %c0_9 = arith.constant 0 : index
    %c0_10 = arith.constant 0 : index
    %10 = vector.load %arg5[%c0_9, %c0_10] : memref<32x64xf32, #tpu.memory_space<vmem>>, vector<32x64xf32>
    %cst_11 = arith.constant dense<0.000000e+00> : vector<8x64xf32>
    %11 = tpu.matmul %2, %10, %cst_11 {dimension_numbers = #tpu.dot_dimension_numbers<[1], [0], [0], [1], [0, 0, 1, 1], [], []>} : vector<8x32xf32>, vector<32x64xf32>, vector<8x64xf32> -> vector<8x64xf32>
    %12 = arith.addf %9, %11 : vector<8x64xf32>
    %c0_12 = arith.constant 0 : index
    %c0_13 = arith.constant 0 : index
    %13 = vector.load %arg6[%c0_12, %c0_13] : memref<1x64xf32, #tpu.memory_space<vmem>>, vector<1x64xf32>
    %14 = vector.broadcast %13 : vector<1x64xf32> to vector<8x64xf32>
    %15 = arith.addf %12, %14 : vector<8x64xf32>
    %cst_14 = arith.constant 0.000000e+00 : f32
    %16 = vector.broadcast %cst_14 : f32 to vector<8x64xf32>
    %17 = arith.maximumf %15, %16 : vector<8x64xf32>
    %c0_15 = arith.constant 0 : index
    %c0_16 = arith.constant 0 : index
    %18 = vector.load %arg7[%c0_15, %c0_16] : memref<1x64xf32, #tpu.memory_space<vmem>>, vector<1x64xf32>
    %19 = vector.broadcast %18 : vector<1x64xf32> to vector<8x64xf32>
    %20 = arith.mulf %17, %19 : vector<8x64xf32>
    %cst_17 = arith.constant dense<0.000000e+00> : vector<8xf32>
    %21 = vector.multi_reduction <add>, %20, %cst_17 [1] : vector<8x64xf32> to vector<8xf32>
    %22 = vector.shape_cast %21 : vector<8xf32> to vector<8x1xf32>
    %c0_18 = arith.constant 0 : index
    %c0_19 = arith.constant 0 : index
    %23 = vector.load %arg8[%c0_18, %c0_19] : memref<1x1xf32, #tpu.memory_space<vmem>>, vector<1x1xf32>
    %24 = vector.broadcast %23 : vector<1x1xf32> to vector<8x1xf32>
    %25 = arith.addf %22, %24 : vector<8x1xf32>
    %c0_20 = arith.constant 0 : index
    %c0_21 = arith.constant 0 : index
    %26 = vector.load %arg9[%c0_20, %c0_21] : memref<8x2xf32, #tpu.memory_space<vmem>>, vector<8x1xf32>
    tpu.vector_store %arg9[%c0_20, %c0_21], %4 {strides = array<i32>} : memref<8x2xf32, #tpu.memory_space<vmem>>, vector<8x1xf32>,
    %c0_22 = arith.constant 0 : index
    %c1 = arith.constant 1 : index
    %27 = vector.load %arg9[%c0_22, %c1] : memref<8x2xf32, #tpu.memory_space<vmem>>, vector<8x1xf32>
    tpu.vector_store %arg9[%c0_22, %c1], %25 {strides = array<i32>} : memref<8x2xf32, #tpu.memory_space<vmem>>, vector<8x1xf32>,
    return
  }
  func.func @transform_0(%arg0: i32) -> (i32, i32) {
    %c0_i32 = arith.constant 0 : i32
    %c0_i32_0 = arith.constant 0 : i32
    return %arg0, %c0_i32 : i32, i32
  }
  func.func @transform_1(%arg0: i32) -> (i32, i32) {
    %c0_i32 = arith.constant 0 : i32
    %c0_i32_0 = arith.constant 0 : i32
    return %arg0, %c0_i32 : i32, i32
  }
  func.func @transform_2(%arg0: i32) -> (i32, i32) {
    %c0_i32 = arith.constant 0 : i32
    %c0_i32_0 = arith.constant 0 : i32
    %c0_i32_1 = arith.constant 0 : i32
    return %c0_i32, %c0_i32_0 : i32, i32
  }
  func.func @transform_3(%arg0: i32) -> (i32, i32) {
    %c0_i32 = arith.constant 0 : i32
    %c0_i32_0 = arith.constant 0 : i32
    %c0_i32_1 = arith.constant 0 : i32
    return %c0_i32, %c0_i32_0 : i32, i32
  }
  func.func @transform_4(%arg0: i32) -> (i32, i32) {
    %c0_i32 = arith.constant 0 : i32
    %c0_i32_0 = arith.constant 0 : i32
    %c0_i32_1 = arith.constant 0 : i32
    return %c0_i32, %c0_i32_0 : i32, i32
  }
  func.func @transform_5(%arg0: i32) -> (i32, i32) {
    %c0_i32 = arith.constant 0 : i32
    %c0_i32_0 = arith.constant 0 : i32
    %c0_i32_1 = arith.constant 0 : i32
    return %c0_i32, %c0_i32_0 : i32, i32
  }
  func.func @transform_6(%arg0: i32) -> (i32, i32) {
    %c0_i32 = arith.constant 0 : i32
    %c0_i32_0 = arith.constant 0 : i32
    %c0_i32_1 = arith.constant 0 : i32
    return %c0_i32, %c0_i32_0 : i32, i32
  }
  func.func @transform_7(%arg0: i32) -> (i32, i32) {
    %c0_i32 = arith.constant 0 : i32
    %c0_i32_0 = arith.constant 0 : i32
    %c0_i32_1 = arith.constant 0 : i32
    return %c0_i32, %c0_i32_0 : i32, i32
  }
  func.func @transform_8(%arg0: i32) -> (i32, i32) {
    %c0_i32 = arith.constant 0 : i32
    %c0_i32_0 = arith.constant 0 : i32
    return %arg0, %c0_i32 : i32, i32
  }
}

</mosaic_0001>

<llo_original>
// kernel: multitask_forward.1
$region0: #{multitask_forward.1}
  #allocation0 [shape = 'u32[]', space=smem, size = 0x4, offset = 0x4, fixed_abs, tag = 'smem constant byte address 0x4 - core index']
  #allocation1 [shape = 'u32[72,128]{1,0:T(1,128)}', space=vmem, size = 0x9000, scoped, tag = 'internal scratch']
  #allocation2 [shape = 'f32[1,1]{1,0:T(1,128)S(1)}', space=vmem, size = 0x200, scoped, tag = 'scoped memory for multitask_forward.1']
  %s0 = inlined_call_operand.vmem [shape: f32[8,32], index: 0, kind: input, shape index: {}]
  %s1 = inlined_call_operand.vmem [shape: f32[8,32], index: 1, kind: input, shape index: {}]
  %s2 = inlined_call_operand.vmem [shape: f32[32,64], index: 2, kind: input, shape index: {}]
  %s3 = inlined_call_operand.vmem [shape: f32[32,64], index: 3, kind: input, shape index: {}]
  %s4 = inlined_call_operand.vmem [shape: f32[32,64], index: 4, kind: input, shape index: {}]
  %s5 = inlined_call_operand.vmem [shape: f32[1,64], index: 5, kind: input, shape index: {}]
  %s6 = inlined_call_operand.vmem [shape: f32[1,64], index: 6, kind: input, shape index: {}]
  %s7 = inlined_call_operand.<no memory space> [shape: f32[1,1], index: 7, kind: input, shape index: {}]
  %s8 = inlined_call_operand.vmem [shape: f32[8,2], index: 8, kind: output, shape index: {}]
  %s9 = sld [smem:[#allocation0]]
  $region42: #{multitask_forward.1} parent=0
    _
  %s11 = ssub.s32 1, %s9
  %s12 = scalar_select 0, %s11, %s9
  %v13 = vstv %s7
  %14 = vst [vmem:[#allocation2] sm:$0x1] %v13
  // Predicated region
  $region2: #{multitask_forward.1} parent=0 // pred_check
    _
  $region3: #{multitask_forward.1} parent=0 // pred_check_branch
    %16 = sbr.rel (0) target = $region5
  $region4: #{multitask_forward.1} parent=0 // pred_region
    _
  $region5: #{multitask_forward.1} parent=0 // pred_fallthru
    _
  // Predicated region
  $region6: #{multitask_forward.1} parent=0 // pred_check
    _
  $region7: #{multitask_forward.1} parent=0 // pred_check_branch
    %18 = sbr.rel (0) target = $region9
  $region8: #{multitask_forward.1} parent=0 // pred_region
    _
  $region9: #{multitask_forward.1} parent=0 // pred_fallthru
    _
  // Predicated region
  $region10: #{multitask_forward.1} parent=0 // pred_check
    _
  $region11: #{multitask_forward.1} parent=0 // pred_check_branch
    %20 = sbr.rel (0) target = $region13
  $region12: #{multitask_forward.1} parent=0 // pred_region
    _
  $region13: #{multitask_forward.1} parent=0 // pred_fallthru
    _
  // Predicated region
  $region14: #{multitask_forward.1} parent=0 // pred_check
    _
  $region15: #{multitask_forward.1} parent=0 // pred_check_branch
    %22 = sbr.rel (0) target = $region17
  $region16: #{multitask_forward.1} parent=0 // pred_region
    _
  $region17: #{multitask_forward.1} parent=0 // pred_fallthru
    _
  // Predicated region
  $region18: #{multitask_forward.1} parent=0 // pred_check
    _
  $region19: #{multitask_forward.1} parent=0 // pred_check_branch
    %24 = sbr.rel (0) target = $region21
  $region20: #{multitask_forward.1} parent=0 // pred_region
    _
  $region21: #{multitask_forward.1} parent=0 // pred_fallthru
    _
  // Predicated region
  $region22: #{multitask_forward.1} parent=0 // pred_check
    _
  $region23: #{multitask_forward.1} parent=0 // pred_check_branch
    %26 = sbr.rel (0) target = $region25
  $region24: #{multitask_forward.1} parent=0 // pred_region
    _
  $region25: #{multitask_forward.1} parent=0 // pred_fallthru
    _
  // Predicated region
  $region26: #{multitask_forward.1} parent=0 // pred_check
    _
  $region27: #{multitask_forward.1} parent=0 // pred_check_branch
    %28 = sbr.rel (0) target = $region29
  $region28: #{multitask_forward.1} parent=0 // pred_region
    _
  $region29: #{multitask_forward.1} parent=0 // pred_fallthru
    _
  // Predicated region
  $region30: #{multitask_forward.1} parent=0 // pred_check
    _
  $region31: #{multitask_forward.1} parent=0 // pred_check_branch
    %30 = sbr.rel (0) target = $region33
  $region32: #{multitask_forward.1} parent=0 // pred_region
    _
  $region33: #{multitask_forward.1} parent=0 // pred_fallthru
    _
  %v31 = vld [vmem:[%s0] sm:$0xff]
  %v32 = vld [vmem:[%s1] sm:$0xff]
  %v33 = vmul.f32 %v31, %v32
  %vm34 = vcmask 261120
  %v35 = vsel %vm34, %v33, 0.0
  %36 = vadd.xlane.f32.xlu0 %v35
  %v37 = vpop.xlane.xlu0 %36
  %v38 = vld [vmem:[%s2] sm:$0xff]
  %v39 = vld [vmem:[%s2 + $0x8] sm:$0xff]
  %v40 = vld [vmem:[%s2 + $0x10] sm:$0xff]
  %v41 = vld [vmem:[%s2 + $0x18] sm:$0xff]
  %v42 = vld [vmem:[%s3] sm:$0xff]
  %v43 = vld [vmem:[%s3 + $0x8] sm:$0xff]
  %v44 = vld [vmem:[%s3 + $0x10] sm:$0xff]
  %v45 = vld [vmem:[%s3 + $0x18] sm:$0xff]
  %v47 = vsel %vm34, %v32, 0
  %49 = vmatpush.msra.mxu0 0.0
  %50 = vmatpush.msra.mxu0 0.0
  %51 = vmatpush.msra.mxu0 0.0
  %52 = vmatpush.msra.mxu0 0.0
  %53 = vmatpush.msra.mxu0 0.0
  %54 = vmatpush.msra.mxu0 0.0
  %55 = vmatpush.msra.mxu0 0.0
  %56 = vmatpush.msra.mxu0 0.0
  %57 = vmatpush.msra.mxu0 0.0
  %58 = vmatpush.msra.mxu0 0.0
  %59 = vmatpush.msra.mxu0 0.0
  %60 = vmatpush.msra.mxu0 0.0
  %61 = vmatpush.msra.mxu0 %v45
  %62 = vmatpush.msra.mxu0 %v44
  %63 = vmatpush.msra.mxu0 %v43
  %64 = vmatpush.msra.mxu0 %v42
  %65 = vmatmul.f32.gmra.mxu0 %v47
  %v66 = vpop.f32.mrf.mxu0
  %v67 = vadd.f32 0.0, %v66
  %68 = vdwg.mxu0
  %v70 = vsel %vm34, %v31, 0
  %72 = vmatpush.msra.mxu0 0.0
  %73 = vmatpush.msra.mxu0 0.0
  %74 = vmatpush.msra.mxu0 0.0
  %75 = vmatpush.msra.mxu0 0.0
  %76 = vmatpush.msra.mxu0 0.0
  %77 = vmatpush.msra.mxu0 0.0
  %78 = vmatpush.msra.mxu0 0.0
  %79 = vmatpush.msra.mxu0 0.0
  %80 = vmatpush.msra.mxu0 0.0
  %81 = vmatpush.msra.mxu0 0.0
  %82 = vmatpush.msra.mxu0 0.0
  %83 = vmatpush.msra.mxu0 0.0
  %84 = vmatpush.msra.mxu0 %v41
  %85 = vmatpush.msra.mxu0 %v40
  %86 = vmatpush.msra.mxu0 %v39
  %87 = vmatpush.msra.mxu0 %v38
  %88 = vmatmul.f32.gmra.mxu0 %v70
  %v89 = vpop.f32.mrf.mxu0
  %v90 = vadd.f32 %v67, %v89
  %91 = vdwg.mxu0
  %v92 = vld [vmem:[%s4] sm:$0xff]
  %v93 = vld [vmem:[%s4 + $0x8] sm:$0xff]
  %v94 = vld [vmem:[%s4 + $0x10] sm:$0xff]
  %v95 = vld [vmem:[%s4 + $0x18] sm:$0xff]
  %v97 = vsel %vm34, %v33, 0
  %99 = vmatpush.msra.mxu0 0.0
  %100 = vmatpush.msra.mxu0 0.0
  %101 = vmatpush.msra.mxu0 0.0
  %102 = vmatpush.msra.mxu0 0.0
  %103 = vmatpush.msra.mxu0 0.0
  %104 = vmatpush.msra.mxu0 0.0
  %105 = vmatpush.msra.mxu0 0.0
  %106 = vmatpush.msra.mxu0 0.0
  %107 = vmatpush.msra.mxu0 0.0
  %108 = vmatpush.msra.mxu0 0.0
  %109 = vmatpush.msra.mxu0 0.0
  %110 = vmatpush.msra.mxu0 0.0
  %111 = vmatpush.msra.mxu0 %v95
  %112 = vmatpush.msra.mxu0 %v94
  %113 = vmatpush.msra.mxu0 %v93
  %114 = vmatpush.msra.mxu0 %v92
  %115 = vmatmul.f32.gmra.mxu0 %v97
  %v116 = vpop.f32.mrf.mxu0
  %v117 = vadd.f32 0.0, %v116
  %118 = vdwg.mxu0
  %v119 = vadd.f32 %v90, %v117
  %v120 = vld [vmem:[%s5] sm:$0x1]
  %v122 = vperm.slane %v120, 0
  %v124 = vadd.f32 %v119, %v122
  %v125 = vmax.f32 %v124, 0.0
  %v126 = vld [vmem:[%s6] sm:$0x1]
  %v128 = vperm.slane %v126, 0
  %v130 = vmul.f32 %v125, %v128
  %vm131 = vcmask 523264
  %v132 = vsel %vm131, %v130, 0.0
  %133 = vadd.xlane.f32.xlu0 %v132
  %v134 = vpop.xlane.xlu0 %133
  %v135 = vld [vmem:[#allocation2] sm:$0x1]
  %v137 = vperm.slane %v135, 0
  %v139 = vadd.f32 %v134, %v137
  %vm140 = vcmask 7168
  %141 = vst.msk [vmem:[%s8] sm:$0xff] %vm140, %v37
  %143 = vrot.lane.b32.xlu0 %v139, 1
  %v144 = vpop.permute.xlu0 %143
  %vm146 = vcmask 15368
  %147 = vst.msk [vmem:[%s8] sm:$0xff] %vm146, %v144
  // Predicated region
  $region34: #{multitask_forward.1} parent=0 // pred_check
    _
  $region35: #{multitask_forward.1} parent=0 // pred_check_branch
    %149 = sbr.rel (0) target = $region37
  $region36: #{multitask_forward.1} parent=0 // pred_region
    _
  $region37: #{multitask_forward.1} parent=0 // pred_fallthru
    _
  // Predicated region
  $region38: #{multitask_forward.1} parent=0 // pred_check
    _
  $region39: #{multitask_forward.1} parent=0 // pred_check_branch
    %151 = sbr.rel (0) target = $region41
  $region40: #{multitask_forward.1} parent=0 // pred_region
    _
  $region41: #{multitask_forward.1} parent=0 // pred_fallthru
    _

</llo_original>
